<compile_context>
chip_gen: v6e
topology: v6e:2x2x1
jax: 0.10.0
libtpu: 0.0.40
codegen_flags: <defaults>
</compile_context>

<pallas_src>
import jax
import jax.numpy as jnp
from jax import lax
from jax.experimental import pallas as pl
from jax.experimental.pallas import tpu as pltpu


def _round_up(a, b):
    return (a + b - 1) // b * b


_VMEM_LIMIT = 48 * 1024 * 1024


# --------------------------------------------------------------------------- #
# Kernel 1: node-space linear  h = x @ W  (W already transposed to [in, out];
# bias is applied later, after degree normalisation -- see kernel 3)
# --------------------------------------------------------------------------- #
def linear_kernel(x_ref, w_ref, h_ref):
    h = jnp.dot(x_ref[...], w_ref[...], preferred_element_type=jnp.float32)
    h_ref[...] = h.astype(h_ref.dtype)


# --------------------------------------------------------------------------- #
# Kernel 2: edge-space gather  h_src[e, :] = h[src[e], :]  (one-hot matmul)
#   grid = (edge tiles,) -- each edge tile is gathered exactly once.
# --------------------------------------------------------------------------- #
def gather_kernel(h_ref, src_ref, hsrc_ref):
    h = h_ref[...]                                   # [N_pad, F_pad] bf16 (resident)
    src = src_ref[...]                               # [Et, 1] int32 (padded edges = -1)
    et = src.shape[0]
    n_total = h.shape[0]

    node_iota = lax.broadcasted_iota(jnp.int32, (et, n_total), 1)
    g = (node_iota == src).astype(h.dtype)           # [Et, N_pad] one-hot (exact in bf16)
    # pure one-hot row selection -> bf16 output is exact; no f32->bf16 cast needed
    hsrc_ref[...] = jnp.dot(g, h, preferred_element_type=hsrc_ref.dtype)


# --------------------------------------------------------------------------- #
# Kernel 3: scatter-add over dst + degree clamp / normalize / bias / relu
#   grid = (node tiles [parallel], edge tiles [arbitrary, reduction])
# --------------------------------------------------------------------------- #
def scatter_kernel(hsrc_ref, dst_ref, b_ref, out_ref, acc_ref, deg_ref):
    n_i = pl.program_id(0)
    e_i = pl.program_id(1)

    @pl.when(e_i == 0)
    def _():
        acc_ref[...] = jnp.zeros_like(acc_ref)
        deg_ref[...] = jnp.zeros_like(deg_ref)

    dst = dst_ref[...]                               # [1, Et] int32 (padded edges = -1)
    h_src = hsrc_ref[...]                            # [Et, F_pad] bf16
    nt = acc_ref.shape[0]
    et = dst.shape[1]

    # one-hot of dst restricted to this node tile; compares stay in int32/bool,
    # sentinel -1 never matches a (non-negative) global row index.
    row_iota = lax.broadcasted_iota(jnp.int32, (nt, et), 0) + n_i * nt
    hit = row_iota == dst                            # [Nt, Et] bool

    acc_ref[...] += jnp.dot(hit.astype(h_src.dtype), h_src,
                            preferred_element_type=jnp.float32)       # [Nt, F_pad] f32
    deg_ref[...] += jnp.sum(hit.astype(jnp.float32), axis=1, keepdims=True)

    # finalize at the last edge tile: clamp, normalise, bias, relu
    @pl.when(e_i == pl.num_programs(1) - 1)
    def _():
        cnt = deg_ref[...]                           # true in-degree (>= 0)
        deg = jnp.maximum(cnt, 1.0)                  # clamp(min=1)
        has_edge = jnp.minimum(cnt, 1.0)             # 0 for isolated nodes
        out = acc_ref[...] / deg + has_edge * b_ref[...]
        out_ref[...] = jnp.maximum(out, 0.0).astype(out_ref.dtype)


# --------------------------------------------------------------------------- #
# Wrapper
# --------------------------------------------------------------------------- #
def gcn_layer(x, edge_index, weight, bias, *, node_tile=256, edge_tile=512,
              compute_dtype=jnp.bfloat16):
    """x: [N, F], edge_index: [2, E] int, weight: [F, F] (torch [out,in]), bias: [F]."""
    N, F = x.shape
    F_out, F_in = weight.shape
    assert F_in == F and F_out == F, "GCNLayer reference requires in_features == out_features"
    E = edge_index.shape[1]

    node_tile = max(16, _round_up(min(node_tile, N), 16))
    edge_tile = max(128, _round_up(min(edge_tile, E), 128))
    F_pad = _round_up(F, 128)                # lane-dense features / outputs
    N_pad = _round_up(N, node_tile)
    E_pad = _round_up(E, edge_tile)
    n_tiles = N_pad // node_tile
    e_tiles = E_pad // edge_tile

    # ---- pad & lay out operands (host side) ---------------------------------
    # bf16 matmul operands; W pre-transposed to [in, out] so kernels use plain dots.
    x_p = jnp.zeros((N_pad, F_pad), compute_dtype).at[:N, :F].set(x.astype(compute_dtype))
    w_p = jnp.zeros((F_pad, F_pad), compute_dtype).at[:F, :F].set(
        weight.T.astype(compute_dtype))
    b_p = jnp.zeros((1, F_pad), jnp.float32).at[0, :F].set(bias.astype(jnp.float32))
    # sentinel -1 for padded edges: never matches a node index -> no contribution.
    # src as a column (gather one-hot orientation), dst as a row (scatter orientation).
    src_p = jnp.full((E_pad, 1), -1, jnp.int32).at[:E, 0].set(edge_index[0].astype(jnp.int32))
    dst_p = jnp.full((1, E_pad), -1, jnp.int32).at[0, :E].set(edge_index[1].astype(jnp.int32))

    # ---- kernel 1: h = x @ W (node space, bf16 operands, f32 accumulate) ----
    h = pl.pallas_call(
        linear_kernel,
        out_shape=jax.ShapeDtypeStruct((N_pad, F_pad), compute_dtype),
        grid=(n_tiles,),
        in_specs=[pl.BlockSpec((node_tile, F_pad), lambda i: (i, 0)),
                  pl.BlockSpec((F_pad, F_pad), lambda i: (0, 0))],
        out_specs=pl.BlockSpec((node_tile, F_pad), lambda i: (i, 0)),
        compiler_params=pltpu.CompilerParams(
            dimension_semantics=("parallel",),
            vmem_limit_bytes=_VMEM_LIMIT),
        cost_estimate=pl.CostEstimate(
            flops=2 * N_pad * F_pad * F_pad,
            transcendentals=0,
            bytes_accessed=2 * N_pad * F_pad + 2 * F_pad * F_pad + 2 * N_pad * F_pad),
    )(x_p, w_p)

    # ---- kernel 2: h_src = onehot(src) @ h   (edge axis only, no n_tiles factor)
    h_src = pl.pallas_call(
        gather_kernel,
        out_shape=jax.ShapeDtypeStruct((E_pad, F_pad), compute_dtype),
        grid=(e_tiles,),
        in_specs=[pl.BlockSpec((N_pad, F_pad), lambda e: (0, 0)),     # h (resident)
                  pl.BlockSpec((edge_tile, 1), lambda e: (e, 0))],    # src column tile
        out_specs=pl.BlockSpec((edge_tile, F_pad), lambda e: (e, 0)),
        compiler_params=pltpu.CompilerParams(
            dimension_semantics=("parallel",),
            vmem_limit_bytes=_VMEM_LIMIT),
        cost_estimate=pl.CostEstimate(
            flops=2 * E_pad * N_pad * F_pad,
            transcendentals=0,
            bytes_accessed=2 * N_pad * F_pad + 4 * E_pad + 2 * E_pad * F_pad),
    )(h, src_p)

    # ---- kernel 3: scatter-add / degree-normalize / bias / relu -------------
    out_pad = pl.pallas_call(
        scatter_kernel,
        out_shape=jax.ShapeDtypeStruct((N_pad, F_pad), jnp.float32),
        grid=(n_tiles, e_tiles),
        in_specs=[
            pl.BlockSpec((edge_tile, F_pad), lambda n, e: (e, 0)),    # h_src tile
            pl.BlockSpec((1, edge_tile), lambda n, e: (0, e)),        # dst tile
            pl.BlockSpec((1, F_pad), lambda n, e: (0, 0)),            # bias
        ],
        out_specs=pl.BlockSpec((node_tile, F_pad), lambda n, e: (n, 0)),
        scratch_shapes=[pltpu.VMEM((node_tile, F_pad), jnp.float32),  # agg accumulator
                        pltpu.VMEM((node_tile, 1), jnp.float32)],     # degree accumulator
        compiler_params=pltpu.CompilerParams(
            dimension_semantics=("parallel", "arbitrary"),
            vmem_limit_bytes=_VMEM_LIMIT),
        cost_estimate=pl.CostEstimate(
            flops=2 * N_pad * E_pad * F_pad,
            transcendentals=0,
            bytes_accessed=n_tiles * (2 * E_pad * F_pad + 4 * E_pad) + 4 * N_pad * F_pad),
    )(h_src, dst_p, b_p)

    return out_pad[:N, :F].astype(x.dtype)


# --------------------------------------------------------------------------- #
# Pure-JAX reference mirroring the PyTorch forward
# --------------------------------------------------------------------------- #
def gcn_layer_ref(x, edge_index, weight, bias):
    N = x.shape[0]
    src, dst = edge_index[0], edge_index[1]
    messages = x[src] @ weight.T + bias
    out = jnp.zeros_like(x).at[dst].add(messages)
    deg = jnp.maximum(jnp.bincount(dst, length=N), 1).astype(jnp.float32)[:, None]
    return jax.nn.relu(out / deg)


if __name__ == "__main__":
    N, F, E = 24, 32, 300   # nodes, features (in == out), edges

    key = jax.random.PRNGKey(0)
    kx, kw, kb, ks, kd = jax.random.split(key, 5)

    x = jax.random.normal(kx, (N, F), dtype=jnp.float32)
    bound = 1.0 / (F ** 0.5)          # nn.Linear default init range
    weight = jax.random.uniform(kw, (F, F), jnp.float32, -bound, bound)
    bias = jax.random.uniform(kb, (F,), jnp.float32, -bound, bound)

    src = jax.random.randint(ks, (E,), 0, N, dtype=jnp.int32)
    dst = jax.random.randint(kd, (E,), 0, N, dtype=jnp.int32)
    edge_index = jnp.stack([src, dst], axis=0)   # [2, E]

    out = gcn_layer(x, edge_index, weight, bias)
    out = jax.block_until_ready(out)

    ref = gcn_layer_ref(x, edge_index, weight, bias)
    assert out.shape == (N, F)
    max_err = float(jnp.max(jnp.abs(out - ref)))
    # bf16 feature / message path (one-hots and f32 scatter accumulation remain exact);
    # documented loosened tolerance per review.
    assert jnp.allclose(out, ref, atol=2e-2, rtol=2e-2), \
        f"mismatch vs reference (max abs err {max_err})"

    print("KERNEL_OK")
</pallas_src>

<mosaic_0001>
module attributes {stable_mosaic.version = 11 : i64} {
  func.func @linear_kernel(%arg0: i32, %arg1: memref<32x128xbf16, #tpu.memory_space<vmem>>, %arg2: memref<128x128xbf16, #tpu.memory_space<vmem>>, %arg3: memref<32x128xbf16, #tpu.memory_space<vmem>>) attributes {dimension_semantics = [#tpu.dimension_semantics<parallel>], iteration_bounds = array<i64: 1>, scalar_prefetch = 0 : i64, scratch_operands = 0 : i64, tpu.core_type = #tpu.core_type<tc>, window_params = [{transform_indices = @transform_0, window_bounds = array<i64: 32, 128>}, {pipeline_mode = #tpu.pipeline_mode<synchronous>, transform_indices = @transform_1, window_bounds = array<i64: 128, 128>}, {transform_indices = @transform_2, window_bounds = array<i64: 32, 128>}]} {
    %c0 = arith.constant 0 : index
    %c0_0 = arith.constant 0 : index
    %0 = vector.load %arg1[%c0, %c0_0] : memref<32x128xbf16, #tpu.memory_space<vmem>>, vector<32x128xbf16>
    %c0_1 = arith.constant 0 : index
    %c0_2 = arith.constant 0 : index
    %1 = vector.load %arg2[%c0_1, %c0_2] : memref<128x128xbf16, #tpu.memory_space<vmem>>, vector<128x128xbf16>
    %cst = arith.constant dense<0.000000e+00> : vector<32x128xf32>
    %2 = tpu.matmul %0, %1, %cst {dimension_numbers = #tpu.dot_dimension_numbers<[1], [0], [0], [1], [0, 0, 1, 1], [], []>} : vector<32x128xbf16>, vector<128x128xbf16>, vector<32x128xf32> -> vector<32x128xf32>
    %3 = arith.truncf %2 : vector<32x128xf32> to vector<32x128xbf16>
    %c0_3 = arith.constant 0 : index
    %c0_4 = arith.constant 0 : index
    %4 = vector.load %arg3[%c0_3, %c0_4] : memref<32x128xbf16, #tpu.memory_space<vmem>>, vector<32x128xbf16>
    tpu.vector_store %arg3[%c0_3, %c0_4], %3 {strides = array<i32>} : memref<32x128xbf16, #tpu.memory_space<vmem>>, vector<32x128xbf16>,
    return
  }
  func.func @transform_0(%arg0: i32) -> (i32, i32) {
    %c0_i32 = arith.constant 0 : i32
    %c0_i32_0 = arith.constant 0 : i32
    return %arg0, %c0_i32 : i32, i32
  }
  func.func @transform_1(%arg0: i32) -> (i32, i32) {
    %c0_i32 = arith.constant 0 : i32
    %c0_i32_0 = arith.constant 0 : i32
    %c0_i32_1 = arith.constant 0 : i32
    return %c0_i32, %c0_i32_0 : i32, i32
  }
  func.func @transform_2(%arg0: i32) -> (i32, i32) {
    %c0_i32 = arith.constant 0 : i32
    %c0_i32_0 = arith.constant 0 : i32
    return %arg0, %c0_i32 : i32, i32
  }
}

</mosaic_0001>

<llo_original>
// kernel: tpu_custom_call.1
$region0: #{tpu_custom_call.1}
  #allocation0 [shape = 'u32[]', space=smem, size = 0x4, offset = 0x4, fixed_abs, tag = 'smem constant byte address 0x4 - core index']
  #allocation1 [shape = 'u32[144,128]{1,0:T(1,128)}', space=vmem, size = 0x12000, scoped, tag = 'internal scratch']
  %s0 = inlined_call_operand.hbm [shape: bf16[32,128], index: 0, kind: input, shape index: {}]
  %s1 = inlined_call_operand.hbm [shape: bf16[128,128], index: 1, kind: input, shape index: {}]
  %s2 = inlined_call_operand.hbm [shape: bf16[32,128], index: 2, kind: output, shape index: {}]
  %s3 = sld [smem:[#allocation0]]
  $region26: #{tpu_custom_call.1} parent=0
    _
  %s5 = ssub.s32 1, %s3
  %s6 = scalar_select 0, %s5, %s3
  $region1: #{tpu_custom_call.1} parent=0
    #allocation2 [shape = 'u8[8192]{0}', space=vmem, size = 0x2000, scoped, tag = 'input window, operand 0, single buffered']
    #allocation3 [shape = 's32[1]{0}', space=sflag, size = 0x4, scoped, tag = 'scoped memory for tpu_custom_call.1']
    #allocation4 [shape = 's32[1]{0}', space=sflag, size = 0x4, scoped, tag = 'scoped memory for tpu_custom_call.1']
    #allocation5 [shape = 'u8[32768]{0}', space=vmem, size = 0x8000, scoped, tag = 'input window, operand 1, single buffered']
    #allocation6 [shape = 's32[1]{0}', space=sflag, size = 0x4, scoped, tag = 'scoped memory for tpu_custom_call.1']
    #allocation7 [shape = 'u8[8192]{0}', space=vmem, size = 0x2000, scoped, tag = 'output window, operand 0, single buffered']
    %7 = vsyncpa [#allocation3], 0
    %8 = vsyncpa [#allocation6], 0
    %9 = vsyncpa [#allocation4], 0
    // Predicated region
    $region2: #{tpu_custom_call.1} parent=1 // pred_check
      _
    $region3: #{tpu_custom_call.1} parent=1 // pred_check_branch
      %11 = sbr.rel (0) target = $region5
    $region4: #{tpu_custom_call.1} parent=1 // pred_region
      %s13 = ssub.s32 256, 256
      %14 = vsyncadd [#allocation3], %s13
      %s15 = sshll.u32 [#allocation2], 4
      %s16 = int_to_ptr.vmem [resolvable:$true] %s15
      %21 = dma.hbm_to_vmem [thread:$0]  %s0, 256, %s16, [#allocation3], 64, 64, 4
    $region5: #{tpu_custom_call.1} parent=1 // pred_fallthru
      _
    // Predicated region
    $region6: #{tpu_custom_call.1} parent=1 // pred_check
      _
    $region7: #{tpu_custom_call.1} parent=1 // pred_check_branch
      %23 = sbr.rel (0) target = $region9
    $region8: #{tpu_custom_call.1} parent=1 // pred_region
      %s25 = ssub.s32 1024, 1024
      %26 = vsyncadd [#allocation6], %s25
      %s27 = sshll.u32 [#allocation5], 4
      %s28 = int_to_ptr.vmem [resolvable:$true] %s27
      %33 = dma.hbm_to_vmem [thread:$0]  %s1, 1024, %s28, [#allocation6], 64, 64, 4
    $region9: #{tpu_custom_call.1} parent=1 // pred_fallthru
      _
    // Predicated region
    $region10: #{tpu_custom_call.1} parent=1 // pred_check
      _
    $region11: #{tpu_custom_call.1} parent=1 // pred_check_branch
      %35 = sbr.rel (0) target = $region13
    $region12: #{tpu_custom_call.1} parent=1 // pred_region
      %36 = dma.done [#allocation3], 256
    $region13: #{tpu_custom_call.1} parent=1 // pred_fallthru
      _
    // Predicated region
    $region14: #{tpu_custom_call.1} parent=1 // pred_check
      _
    $region15: #{tpu_custom_call.1} parent=1 // pred_check_branch
      %38 = sbr.rel (0) target = $region17
    $region16: #{tpu_custom_call.1} parent=1 // pred_region
      %39 = dma.done [#allocation6], 1024
    $region17: #{tpu_custom_call.1} parent=1 // pred_fallthru
      _
    %v41 = vld [vmem:[#allocation2] sm:$0xf]
    %v42 = vld [vmem:[#allocation2 + $0x4] sm:$0xf]
    %v43 = vld [vmem:[#allocation2 + $0x8] sm:$0xf]
    %v44 = vld [vmem:[#allocation2 + $0xc] sm:$0xf]
    %v45 = vld [vmem:[#allocation5] sm:$0xf]
    %v46 = vld [vmem:[#allocation5 + $0x4] sm:$0xf]
    %v47 = vld [vmem:[#allocation5 + $0x8] sm:$0xf]
    %v48 = vld [vmem:[#allocation5 + $0xc] sm:$0xf]
    %v49 = vld [vmem:[#allocation5 + $0x10] sm:$0xf]
    %v50 = vld [vmem:[#allocation5 + $0x14] sm:$0xf]
    %v51 = vld [vmem:[#allocation5 + $0x18] sm:$0xf]
    %v52 = vld [vmem:[#allocation5 + $0x1c] sm:$0xf]
    %v53 = vld [vmem:[#allocation5 + $0x20] sm:$0xf]
    %v54 = vld [vmem:[#allocation5 + $0x24] sm:$0xf]
    %v55 = vld [vmem:[#allocation5 + $0x28] sm:$0xf]
    %v56 = vld [vmem:[#allocation5 + $0x2c] sm:$0xf]
    %v57 = vld [vmem:[#allocation5 + $0x30] sm:$0xf]
    %v58 = vld [vmem:[#allocation5 + $0x34] sm:$0xf]
    %v59 = vld [vmem:[#allocation5 + $0x38] sm:$0xf]
    %v60 = vld [vmem:[#allocation5 + $0x3c] sm:$0xf]
    %v65 = vunpack.c.l.b16 %v41
    %v66 = vunpack.c.l.b16 %v42
    %v67 = vunpack.c.l.b16 %v43
    %v68 = vunpack.c.l.b16 %v44
    %v69 = vpack.c.b16 %v66, %v65
    %v70 = vpack.c.b16 %v68, %v67
    %v89 = vunpack.c.l.b16 %v45
    %v90 = vunpack.c.l.b16 %v46
    %v91 = vunpack.c.l.b16 %v47
    %v92 = vunpack.c.l.b16 %v48
    %v93 = vunpack.c.l.b16 %v49
    %v94 = vunpack.c.l.b16 %v50
    %v95 = vunpack.c.l.b16 %v51
    %v96 = vunpack.c.l.b16 %v52
    %v97 = vunpack.c.l.b16 %v53
    %v98 = vunpack.c.l.b16 %v54
    %v99 = vunpack.c.l.b16 %v55
    %v100 = vunpack.c.l.b16 %v56
    %v101 = vunpack.c.l.b16 %v57
    %v102 = vunpack.c.l.b16 %v58
    %v103 = vunpack.c.l.b16 %v59
    %v104 = vunpack.c.l.b16 %v60
    %v105 = vpack.c.b16 %v90, %v89
    %v106 = vpack.c.b16 %v92, %v91
    %v107 = vpack.c.b16 %v94, %v93
    %v108 = vpack.c.b16 %v96, %v95
    %v109 = vpack.c.b16 %v98, %v97
    %v110 = vpack.c.b16 %v100, %v99
    %v111 = vpack.c.b16 %v102, %v101
    %v112 = vpack.c.b16 %v104, %v103
    %121 = vmatprep.subr.bf16.mxu0 0
    %122 = vmatpush1.bf16.msra.mxu0 %v112
    %123 = vmatprep.subr.bf16.mxu0 0
    %124 = vmatpush1.bf16.msra.mxu0 %v111
    %125 = vmatprep.subr.bf16.mxu0 0
    %126 = vmatpush1.bf16.msra.mxu0 %v110
    %127 = vmatprep.subr.bf16.mxu0 0
    %128 = vmatpush1.bf16.msra.mxu0 %v109
    %129 = vmatprep.subr.bf16.mxu0 0
    %130 = vmatpush1.bf16.msra.mxu0 %v108
    %131 = vmatprep.subr.bf16.mxu0 0
    %132 = vmatpush1.bf16.msra.mxu0 %v107
    %133 = vmatprep.subr.bf16.mxu0 0
    %134 = vmatpush1.bf16.msra.mxu0 %v106
    %135 = vmatprep.subr.bf16.mxu0 0
    %136 = vmatpush1.bf16.msra.mxu0 %v105
    %137 = vmatprep.subr.bf16.mxu0 0
    %138 = vmatpush2.bf16.msra.mxu0 0
    %139 = vmatprep.subr.bf16.mxu0 0
    %140 = vmatpush2.bf16.msra.mxu0 0
    %141 = vmatprep.subr.bf16.mxu0 0
    %142 = vmatpush2.bf16.msra.mxu0 0
    %143 = vmatprep.subr.bf16.mxu0 0
    %144 = vmatpush2.bf16.msra.mxu0 0
    %145 = vmatprep.subr.bf16.mxu0 0
    %146 = vmatpush2.bf16.msra.mxu0 0
    %147 = vmatprep.subr.bf16.mxu0 0
    %148 = vmatpush2.bf16.msra.mxu0 0
    %149 = vmatprep.subr.bf16.mxu0 0
    %150 = vmatpush2.bf16.msra.mxu0 0
    %151 = vmatprep.subr.bf16.mxu0 0
    %152 = vmatpush2.bf16.msra.mxu0 0
    %153 = vmatprep.mubr.bf16.mxu0 0
    %154 = vmatmul.mubr.bf16.gmra.mxu0 %v69
    %v155 = vpop.f32.mrf.mxu0
    %v156 = vadd.f32 0.0, %v155
    %v157 = vpop.f32.mrf.mxu0
    %v158 = vpop.f32.mrf.mxu0
    %v159 = vadd.f32 0.0, %v158
    %v160 = vpop.f32.mrf.mxu0
    %161 = vmatprep.mubr.bf16.mxu0 0
    %162 = vmatmul.mubr.bf16.gmra.mxu0 %v70
    %v163 = vpop.f32.mrf.mxu0
    %v164 = vadd.f32 0.0, %v163
    %v165 = vpop.f32.mrf.mxu0
    %v166 = vpop.f32.mrf.mxu0
    %v167 = vadd.f32 0.0, %v166
    %v168 = vpop.f32.mrf.mxu0
    %169 = vdwg.mxu0
    %v170 = vpack.c.bf16 %v159, %v156
    %v171 = vpack.c.bf16 %v167, %v164
    %v174 = vunpack.c.l.b16 %v170
    %v175 = vunpack.c.h.b16 %v170
    %v176 = vunpack.c.l.b16 %v171
    %v177 = vunpack.c.h.b16 %v171
    %v178 = vpack.c.b16 %v174, %v174
    %v179 = vpack.c.b16 %v175, %v175
    %v180 = vpack.c.b16 %v176, %v176
    %v181 = vpack.c.b16 %v177, %v177
    %186 = vst [vmem:[#allocation7] sm:$0xf] %v178
    %187 = vst [vmem:[#allocation7 + $0x4] sm:$0xf] %v179
    %188 = vst [vmem:[#allocation7 + $0x8] sm:$0xf] %v180
    %189 = vst [vmem:[#allocation7 + $0xc] sm:$0xf] %v181
    // Predicated region
    $region18: #{tpu_custom_call.1} parent=1 // pred_check
      _
    $region19: #{tpu_custom_call.1} parent=1 // pred_check_branch
      %191 = sbr.rel (0) target = $region21
    $region20: #{tpu_custom_call.1} parent=1 // pred_region
      %s193 = ssub.s32 256, 256
      %194 = vsyncadd [#allocation4], %s193
      %s195 = sshll.u32 [#allocation7], 4
      %s196 = int_to_ptr.vmem [resolvable:$true] %s195
      %201 = dma.vmem_to_hbm [thread:$0]  %s196, 256, %s2, [#allocation4], 64, 64, 4
    $region21: #{tpu_custom_call.1} parent=1 // pred_fallthru
      _
    // Predicated region
    $region22: #{tpu_custom_call.1} parent=1 // pred_check
      _
    $region23: #{tpu_custom_call.1} parent=1 // pred_check_branch
      %203 = sbr.rel (0) target = $region25
    $region24: #{tpu_custom_call.1} parent=1 // pred_region
      %204 = dma.done [#allocation4], 256
    $region25: #{tpu_custom_call.1} parent=1 // pred_fallthru
      _
    %205 = vsyncpa [#allocation3], 1
    %206 = vsyncpa [#allocation6], 1
    %207 = vsyncpa [#allocation4], 1

</llo_original>
